<compile_context>
chip_gen: v6e
topology: v6e:2x2x1
jax: 0.10.0
libtpu: 0.0.40
codegen_flags: <defaults>
</compile_context>

<pallas_src>
import functools

import jax
import jax.numpy as jnp
from jax.experimental import pallas as pl
from jax.experimental.pallas import tpu as pltpu


def _residual_block_kernel(H, W, x_ref, w1_ref, w2_ref, bn_ref, mask_ref,
                           out_ref, cols_scr):
    """One batch element per grid step, channels on sublanes, H*W on lanes.

    x_ref    : (1, C, H*W)    f32   input image, spatial flattened
    w1_ref   : (C, 9*C)       bf16  conv1 weights, K ordered (dh, dw, ci)
    w2_ref   : (C, 9*C)       bf16  conv2 weights, K ordered (dh, dw, ci)
    bn_ref   : (4, C, 1)      f32   rows = [scale1, shift1, scale2, shift2]
    mask_ref : (9, H*W)       f32   per-tap border masks (pad=1 semantics)
    out_ref  : (1, C, H*W)
    cols_scr : (9*C, H*W)     f32   VMEM scratch for the im2col operand
    """
    C = x_ref.shape[1]
    HW = x_ref.shape[2]

    x = x_ref[0]                       # (C, HW) f32
    bn = bn_ref[...]                   # (4, C, 1) f32
    masks = mask_ref[...]              # (9, HW) f32

    def im2col(y):
        """Write the 9 shifted+masked copies of y into cols_scr, return as bf16.

        For tap offset (ddh, ddw), the shift in the flattened spatial index is
        s = ddh*W + ddw; pltpu.roll by (-s) mod HW gives shifted[p] = y[(p+s)%HW],
        and the precomputed border mask zeroes the wrapped / out-of-image lanes,
        reproducing a 3x3 / stride 1 / pad 1 convolution window exactly.
        """
        t = 0
        for ddh in (-1, 0, 1):
            for ddw in (-1, 0, 1):
                s = ddh * W + ddw
                if s == 0:
                    tap = y                              # center tap: mask is all-ones
                else:
                    shifted = pltpu.roll(y, (-s) % HW, 1)   # XLU lane rotate
                    tap = shifted * masks[t:t + 1, :]
                cols_scr[t * C:(t + 1) * C, :] = tap
                t += 1
        return cols_scr[...].astype(jnp.bfloat16)        # (9*C, HW)

    # ---- conv1 as a single lane-dense im2col matmul on the MXU ----
    cols1 = im2col(x)
    acc1 = jnp.dot(w1_ref[...], cols1, preferred_element_type=jnp.float32)
    # BN1 (folded affine) + ReLU
    y1 = jnp.maximum(acc1 * bn[0] + bn[1], 0.0)          # (C, HW) f32

    # ---- conv2 ----
    cols2 = im2col(y1)
    acc2 = jnp.dot(w2_ref[...], cols2, preferred_element_type=jnp.float32)
    # BN2 + identity residual + ReLU
    y2 = acc2 * bn[2] + bn[3]
    out_ref[0] = jnp.maximum(y2 + x, 0.0).astype(out_ref.dtype)


def residual_block_nchw(x_nchw, w1_oihw, w2_oihw, bn1, bn2, eps=1e-5):
    """PyTorch-facing wrapper: NCHW input, OIHW weights, BN param dicts."""
    N, Cin, H, W = x_nchw.shape
    Cout = w1_oihw.shape[0]
    assert Cin == Cout, "identity shortcut requires inchannel == outchannel"
    HW = H * W

    # NCHW -> (N, C, H*W): pure reshape (channel-major already), free layout plumbing.
    x = x_nchw.reshape(N, Cin, HW).astype(jnp.float32)

    # Fold BN running stats into per-channel scale/shift; ship all four vectors
    # as one (4, C, 1) array -> single DMA per grid step.
    def fold(bn):
        scale = bn["gamma"] / jnp.sqrt(bn["var"] + eps)
        shift = bn["beta"] - bn["mean"] * scale
        return scale, shift

    s1, b1 = fold(bn1)
    s2, b2 = fold(bn2)
    bn_params = jnp.stack([s1, b1, s2, b2]).reshape(4, Cout, 1).astype(jnp.float32)

    # OIHW -> (Cout, 9*Cin) with K ordered (dh, dw, ci); bf16 for the MXU.
    def flat_w(w_oihw):
        ci = w_oihw.shape[1]
        return (jnp.transpose(w_oihw, (0, 2, 3, 1))
                .reshape(Cout, 9 * ci).astype(jnp.bfloat16))

    w1m = flat_w(w1_oihw)
    w2m = flat_w(w2_oihw)

    # Precomputed border masks for a 3x3 / stride 1 / pad 1 conv in the
    # flattened-spatial layout (tap order matches the weight K ordering).
    hh = jnp.arange(H)[:, None]
    ww = jnp.arange(W)[None, :]
    rows = []
    for ddh in (-1, 0, 1):
        for ddw in (-1, 0, 1):
            m = ((hh + ddh >= 0) & (hh + ddh < H) &
                 (ww + ddw >= 0) & (ww + ddw < W))
            rows.append(m.reshape(HW))
    masks = jnp.stack(rows).astype(jnp.float32)          # (9, HW)

    grid_spec = pltpu.PrefetchScalarGridSpec(
        num_scalar_prefetch=0,
        grid=(N,),
        in_specs=[
            pl.BlockSpec((1, Cin, HW), lambda n: (n, 0, 0)),      # x
            pl.BlockSpec((Cout, 9 * Cin), lambda n: (0, 0)),      # w1
            pl.BlockSpec((Cout, 9 * Cout), lambda n: (0, 0)),     # w2
            pl.BlockSpec((4, Cout, 1), lambda n: (0, 0, 0)),      # bn params
            pl.BlockSpec((9, HW), lambda n: (0, 0)),              # border masks
        ],
        out_specs=pl.BlockSpec((1, Cout, HW), lambda n: (n, 0, 0)),
        scratch_shapes=[pltpu.VMEM((9 * Cin, HW), jnp.float32)],  # im2col scratch
    )

    out = pl.pallas_call(
        functools.partial(_residual_block_kernel, H, W),
        out_shape=jax.ShapeDtypeStruct((N, Cout, HW), x_nchw.dtype),
        grid_spec=grid_spec,
        compiler_params=pltpu.CompilerParams(
            dimension_semantics=("parallel",)),       # shards batch over v7x's 2 TCs
    )(x, w1m, w2m, bn_params, masks)

    return out.reshape(N, Cout, H, W)                 # back to NCHW


def _reference_nchw(x_nchw, w1_oihw, w2_oihw, bn1, bn2, eps=1e-5):
    """Pure-JAX reference (same math, XLA conv in f32) for correctness check."""
    dn = ("NCHW", "OIHW", "NCHW")

    def bn_apply(y, bn):
        scale = (bn["gamma"] / jnp.sqrt(bn["var"] + eps)).reshape(1, -1, 1, 1)
        shift = (bn["beta"] - bn["mean"] * bn["gamma"] /
                 jnp.sqrt(bn["var"] + eps)).reshape(1, -1, 1, 1)
        return y * scale + shift

    conv = functools.partial(jax.lax.conv_general_dilated,
                             window_strides=(1, 1), padding="SAME",
                             dimension_numbers=dn,
                             precision=jax.lax.Precision.HIGHEST)
    y = conv(x_nchw, w1_oihw)
    y = jnp.maximum(bn_apply(y, bn1), 0.0)
    y = conv(y, w2_oihw)
    y = bn_apply(y, bn2)
    return jnp.maximum(y + x_nchw, 0.0)


if __name__ == "__main__":
    # ResidualBlock(inchannel=4, outchannel=4, stride=1, shortcut=None)
    N, C, H, W = 2, 4, 16, 16

    key = jax.random.PRNGKey(0)
    k_x, k_w1, k_w2, k_g1, k_b1, k_m1, k_v1, k_g2, k_b2, k_m2, k_v2 = \
        jax.random.split(key, 11)

    x = jax.random.normal(k_x, (N, C, H, W), jnp.float32)            # NCHW like PyTorch
    w1 = 0.1 * jax.random.normal(k_w1, (C, C, 3, 3), jnp.float32)    # OIHW
    w2 = 0.1 * jax.random.normal(k_w2, (C, C, 3, 3), jnp.float32)

    bn1 = dict(gamma=jax.random.uniform(k_g1, (C,), jnp.float32, 0.5, 1.5),
               beta=0.1 * jax.random.normal(k_b1, (C,), jnp.float32),
               mean=0.1 * jax.random.normal(k_m1, (C,), jnp.float32),
               var=jax.random.uniform(k_v1, (C,), jnp.float32, 0.5, 1.5))
    bn2 = dict(gamma=jax.random.uniform(k_g2, (C,), jnp.float32, 0.5, 1.5),
               beta=0.1 * jax.random.normal(k_b2, (C,), jnp.float32),
               mean=0.1 * jax.random.normal(k_m2, (C,), jnp.float32),
               var=jax.random.uniform(k_v2, (C,), jnp.float32, 0.5, 1.5))

    out = jax.jit(residual_block_nchw)(x, w1, w2, bn1, bn2)
    out = jax.block_until_ready(out)

    ref = jax.block_until_ready(_reference_nchw(x, w1, w2, bn1, bn2))
    assert out.shape == (N, C, H, W)
    # bf16 MXU operands (f32 accumulation) -> slightly looser tolerance than f32.
    assert jnp.allclose(out, ref, atol=2e-2, rtol=2e-2), \
        f"max abs err {jnp.max(jnp.abs(out - ref))}"

    print("KERNEL_OK")
</pallas_src>

<mosaic_0001>
module attributes {stable_mosaic.version = 11 : i64} {
  func.func @_residual_block_kernel(%arg0: i32, %arg1: memref<1x4x256xf32, #tpu.memory_space<vmem>>, %arg2: memref<4x36xbf16, #tpu.memory_space<vmem>>, %arg3: memref<4x36xbf16, #tpu.memory_space<vmem>>, %arg4: memref<4x4x1xf32, #tpu.memory_space<vmem>>, %arg5: memref<9x256xf32, #tpu.memory_space<vmem>>, %arg6: memref<1x4x256xf32, #tpu.memory_space<vmem>>, %arg7: memref<36x256xf32, #tpu.memory_space<vmem>>) attributes {dimension_semantics = [#tpu.dimension_semantics<parallel>], iteration_bounds = array<i64: 2>, scalar_prefetch = 0 : i64, scratch_operands = 1 : i64, tpu.core_type = #tpu.core_type<tc>, window_params = [{transform_indices = @transform_0, window_bounds = array<i64: 1, 4, 256>}, {pipeline_mode = #tpu.pipeline_mode<synchronous>, transform_indices = @transform_1, window_bounds = array<i64: 4, 36>}, {pipeline_mode = #tpu.pipeline_mode<synchronous>, transform_indices = @transform_2, window_bounds = array<i64: 4, 36>}, {pipeline_mode = #tpu.pipeline_mode<synchronous>, transform_indices = @transform_3, window_bounds = array<i64: 4, 4, 1>}, {pipeline_mode = #tpu.pipeline_mode<synchronous>, transform_indices = @transform_4, window_bounds = array<i64: 9, 256>}, {transform_indices = @transform_5, window_bounds = array<i64: 1, 4, 256>}]} {
    %c0 = arith.constant 0 : index
    %c0_0 = arith.constant 0 : index
    %c0_1 = arith.constant 0 : index
    %0 = vector.load %arg1[%c0, %c0_0, %c0_1] : memref<1x4x256xf32, #tpu.memory_space<vmem>>, vector<1x4x256xf32>
    %1 = vector.shape_cast %0 : vector<1x4x256xf32> to vector<4x256xf32>
    %c0_2 = arith.constant 0 : index
    %c0_3 = arith.constant 0 : index
    %c0_4 = arith.constant 0 : index
    %2 = vector.load %arg4[%c0_2, %c0_3, %c0_4] : memref<4x4x1xf32, #tpu.memory_space<vmem>>, vector<4x4x1xf32>
    %c0_5 = arith.constant 0 : index
    %c0_6 = arith.constant 0 : index
    %3 = vector.load %arg5[%c0_5, %c0_6] : memref<9x256xf32, #tpu.memory_space<vmem>>, vector<9x256xf32>
    %c17_i32 = arith.constant 17 : i32
    %4 = tpu.dynamic_rotate %1 by %c17_i32 dim 1 : vector<4x256xf32>, i32 -> vector<4x256xf32>
    %5 = vector.extract_strided_slice %3 {offsets = [0, 0], sizes = [1, 256], strides = [1, 1]} : vector<9x256xf32> to vector<1x256xf32>
    %6 = vector.broadcast %5 : vector<1x256xf32> to vector<4x256xf32>
    %7 = arith.mulf %4, %6 : vector<4x256xf32>
    %c0_7 = arith.constant 0 : index
    %c0_8 = arith.constant 0 : index
    %8 = vector.load %arg7[%c0_7, %c0_8] : memref<36x256xf32, #tpu.memory_space<vmem>>, vector<4x256xf32>
    tpu.vector_store %arg7[%c0_7, %c0_8], %7 {strides = array<i32>} : memref<36x256xf32, #tpu.memory_space<vmem>>, vector<4x256xf32>,
    %c16_i32 = arith.constant 16 : i32
    %9 = tpu.dynamic_rotate %1 by %c16_i32 dim 1 : vector<4x256xf32>, i32 -> vector<4x256xf32>
    %10 = vector.extract_strided_slice %3 {offsets = [1, 0], sizes = [1, 256], strides = [1, 1]} : vector<9x256xf32> to vector<1x256xf32>
    %11 = vector.broadcast %10 : vector<1x256xf32> to vector<4x256xf32>
    %12 = arith.mulf %9, %11 : vector<4x256xf32>
    %c4 = arith.constant 4 : index
    %c0_9 = arith.constant 0 : index
    %13 = vector.load %arg7[%c4, %c0_9] : memref<36x256xf32, #tpu.memory_space<vmem>>, vector<4x256xf32>
    tpu.vector_store %arg7[%c4, %c0_9], %12 {strides = array<i32>} : memref<36x256xf32, #tpu.memory_space<vmem>>, vector<4x256xf32>,
    %c15_i32 = arith.constant 15 : i32
    %14 = tpu.dynamic_rotate %1 by %c15_i32 dim 1 : vector<4x256xf32>, i32 -> vector<4x256xf32>
    %15 = vector.extract_strided_slice %3 {offsets = [2, 0], sizes = [1, 256], strides = [1, 1]} : vector<9x256xf32> to vector<1x256xf32>
    %16 = vector.broadcast %15 : vector<1x256xf32> to vector<4x256xf32>
    %17 = arith.mulf %14, %16 : vector<4x256xf32>
    %c8 = arith.constant 8 : index
    %c0_10 = arith.constant 0 : index
    %18 = vector.load %arg7[%c8, %c0_10] : memref<36x256xf32, #tpu.memory_space<vmem>>, vector<4x256xf32>
    tpu.vector_store %arg7[%c8, %c0_10], %17 {strides = array<i32>} : memref<36x256xf32, #tpu.memory_space<vmem>>, vector<4x256xf32>,
    %c1_i32 = arith.constant 1 : i32
    %19 = tpu.dynamic_rotate %1 by %c1_i32 dim 1 : vector<4x256xf32>, i32 -> vector<4x256xf32>
    %20 = vector.extract_strided_slice %3 {offsets = [3, 0], sizes = [1, 256], strides = [1, 1]} : vector<9x256xf32> to vector<1x256xf32>
    %21 = vector.broadcast %20 : vector<1x256xf32> to vector<4x256xf32>
    %22 = arith.mulf %19, %21 : vector<4x256xf32>
    %c12 = arith.constant 12 : index
    %c0_11 = arith.constant 0 : index
    %23 = vector.load %arg7[%c12, %c0_11] : memref<36x256xf32, #tpu.memory_space<vmem>>, vector<4x256xf32>
    tpu.vector_store %arg7[%c12, %c0_11], %22 {strides = array<i32>} : memref<36x256xf32, #tpu.memory_space<vmem>>, vector<4x256xf32>,
    %c16 = arith.constant 16 : index
    %c0_12 = arith.constant 0 : index
    %24 = vector.load %arg7[%c16, %c0_12] : memref<36x256xf32, #tpu.memory_space<vmem>>, vector<4x256xf32>
    tpu.vector_store %arg7[%c16, %c0_12], %1 {strides = array<i32>} : memref<36x256xf32, #tpu.memory_space<vmem>>, vector<4x256xf32>,
    %c255_i32 = arith.constant 255 : i32
    %25 = tpu.dynamic_rotate %1 by %c255_i32 dim 1 : vector<4x256xf32>, i32 -> vector<4x256xf32>
    %26 = vector.extract_strided_slice %3 {offsets = [5, 0], sizes = [1, 256], strides = [1, 1]} : vector<9x256xf32> to vector<1x256xf32>
    %27 = vector.broadcast %26 : vector<1x256xf32> to vector<4x256xf32>
    %28 = arith.mulf %25, %27 : vector<4x256xf32>
    %c20 = arith.constant 20 : index
    %c0_13 = arith.constant 0 : index
    %29 = vector.load %arg7[%c20, %c0_13] : memref<36x256xf32, #tpu.memory_space<vmem>>, vector<4x256xf32>
    tpu.vector_store %arg7[%c20, %c0_13], %28 {strides = array<i32>} : memref<36x256xf32, #tpu.memory_space<vmem>>, vector<4x256xf32>,
    %c241_i32 = arith.constant 241 : i32
    %30 = tpu.dynamic_rotate %1 by %c241_i32 dim 1 : vector<4x256xf32>, i32 -> vector<4x256xf32>
    %31 = vector.extract_strided_slice %3 {offsets = [6, 0], sizes = [1, 256], strides = [1, 1]} : vector<9x256xf32> to vector<1x256xf32>
    %32 = vector.broadcast %31 : vector<1x256xf32> to vector<4x256xf32>
    %33 = arith.mulf %30, %32 : vector<4x256xf32>
    %c24 = arith.constant 24 : index
    %c0_14 = arith.constant 0 : index
    %34 = vector.load %arg7[%c24, %c0_14] : memref<36x256xf32, #tpu.memory_space<vmem>>, vector<4x256xf32>
    tpu.vector_store %arg7[%c24, %c0_14], %33 {strides = array<i32>} : memref<36x256xf32, #tpu.memory_space<vmem>>, vector<4x256xf32>,
    %c240_i32 = arith.constant 240 : i32
    %35 = tpu.dynamic_rotate %1 by %c240_i32 dim 1 : vector<4x256xf32>, i32 -> vector<4x256xf32>
    %36 = vector.extract_strided_slice %3 {offsets = [7, 0], sizes = [1, 256], strides = [1, 1]} : vector<9x256xf32> to vector<1x256xf32>
    %37 = vector.broadcast %36 : vector<1x256xf32> to vector<4x256xf32>
    %38 = arith.mulf %35, %37 : vector<4x256xf32>
    %c28 = arith.constant 28 : index
    %c0_15 = arith.constant 0 : index
    %39 = vector.load %arg7[%c28, %c0_15] : memref<36x256xf32, #tpu.memory_space<vmem>>, vector<4x256xf32>
    tpu.vector_store %arg7[%c28, %c0_15], %38 {strides = array<i32>} : memref<36x256xf32, #tpu.memory_space<vmem>>, vector<4x256xf32>,
    %c239_i32 = arith.constant 239 : i32
    %40 = tpu.dynamic_rotate %1 by %c239_i32 dim 1 : vector<4x256xf32>, i32 -> vector<4x256xf32>
    %41 = vector.extract_strided_slice %3 {offsets = [8, 0], sizes = [1, 256], strides = [1, 1]} : vector<9x256xf32> to vector<1x256xf32>
    %42 = vector.broadcast %41 : vector<1x256xf32> to vector<4x256xf32>
    %43 = arith.mulf %40, %42 : vector<4x256xf32>
    %c32 = arith.constant 32 : index
    %c0_16 = arith.constant 0 : index
    %44 = vector.load %arg7[%c32, %c0_16] : memref<36x256xf32, #tpu.memory_space<vmem>>, vector<4x256xf32>
    tpu.vector_store %arg7[%c32, %c0_16], %43 {strides = array<i32>} : memref<36x256xf32, #tpu.memory_space<vmem>>, vector<4x256xf32>,
    %c0_17 = arith.constant 0 : index
    %c0_18 = arith.constant 0 : index
    %45 = vector.load %arg7[%c0_17, %c0_18] : memref<36x256xf32, #tpu.memory_space<vmem>>, vector<36x256xf32>
    %46 = arith.truncf %45 : vector<36x256xf32> to vector<36x256xbf16>
    %c0_19 = arith.constant 0 : index
    %c0_20 = arith.constant 0 : index
    %47 = vector.load %arg2[%c0_19, %c0_20] : memref<4x36xbf16, #tpu.memory_space<vmem>>, vector<4x36xbf16>
    %cst = arith.constant dense<0.000000e+00> : vector<4x256xf32>
    %48 = tpu.matmul %47, %46, %cst {dimension_numbers = #tpu.dot_dimension_numbers<[1], [0], [0], [1], [0, 0, 1, 1], [], []>} : vector<4x36xbf16>, vector<36x256xbf16>, vector<4x256xf32> -> vector<4x256xf32>
    %49 = vector.extract_strided_slice %2 {offsets = [0, 0, 0], sizes = [1, 4, 1], strides = [1, 1, 1]} : vector<4x4x1xf32> to vector<1x4x1xf32>
    %50 = vector.shape_cast %49 : vector<1x4x1xf32> to vector<4x1xf32>
    %51 = vector.broadcast %50 : vector<4x1xf32> to vector<4x256xf32>
    %52 = arith.mulf %48, %51 : vector<4x256xf32>
    %53 = vector.extract_strided_slice %2 {offsets = [1, 0, 0], sizes = [1, 4, 1], strides = [1, 1, 1]} : vector<4x4x1xf32> to vector<1x4x1xf32>
    %54 = vector.shape_cast %53 : vector<1x4x1xf32> to vector<4x1xf32>
    %55 = vector.broadcast %54 : vector<4x1xf32> to vector<4x256xf32>
    %56 = arith.addf %52, %55 : vector<4x256xf32>
    %cst_21 = arith.constant 0.000000e+00 : f32
    %57 = vector.broadcast %cst_21 : f32 to vector<4x256xf32>
    %58 = arith.maximumf %56, %57 : vector<4x256xf32>
    %c17_i32_22 = arith.constant 17 : i32
    %59 = tpu.dynamic_rotate %58 by %c17_i32_22 dim 1 : vector<4x256xf32>, i32 -> vector<4x256xf32>
    %60 = vector.extract_strided_slice %3 {offsets = [0, 0], sizes = [1, 256], strides = [1, 1]} : vector<9x256xf32> to vector<1x256xf32>
    %61 = vector.broadcast %60 : vector<1x256xf32> to vector<4x256xf32>
    %62 = arith.mulf %59, %61 : vector<4x256xf32>
    %c0_23 = arith.constant 0 : index
    %c0_24 = arith.constant 0 : index
    %63 = vector.load %arg7[%c0_23, %c0_24] : memref<36x256xf32, #tpu.memory_space<vmem>>, vector<4x256xf32>
    tpu.vector_store %arg7[%c0_23, %c0_24], %62 {strides = array<i32>} : memref<36x256xf32, #tpu.memory_space<vmem>>, vector<4x256xf32>,
    %c16_i32_25 = arith.constant 16 : i32
    %64 = tpu.dynamic_rotate %58 by %c16_i32_25 dim 1 : vector<4x256xf32>, i32 -> vector<4x256xf32>
    %65 = vector.extract_strided_slice %3 {offsets = [1, 0], sizes = [1, 256], strides = [1, 1]} : vector<9x256xf32> to vector<1x256xf32>
    %66 = vector.broadcast %65 : vector<1x256xf32> to vector<4x256xf32>
    %67 = arith.mulf %64, %66 : vector<4x256xf32>
    %c4_26 = arith.constant 4 : index
    %c0_27 = arith.constant 0 : index
    %68 = vector.load %arg7[%c4_26, %c0_27] : memref<36x256xf32, #tpu.memory_space<vmem>>, vector<4x256xf32>
    tpu.vector_store %arg7[%c4_26, %c0_27], %67 {strides = array<i32>} : memref<36x256xf32, #tpu.memory_space<vmem>>, vector<4x256xf32>,
    %c15_i32_28 = arith.constant 15 : i32
    %69 = tpu.dynamic_rotate %58 by %c15_i32_28 dim 1 : vector<4x256xf32>, i32 -> vector<4x256xf32>
    %70 = vector.extract_strided_slice %3 {offsets = [2, 0], sizes = [1, 256], strides = [1, 1]} : vector<9x256xf32> to vector<1x256xf32>
    %71 = vector.broadcast %70 : vector<1x256xf32> to vector<4x256xf32>
    %72 = arith.mulf %69, %71 : vector<4x256xf32>
    %c8_29 = arith.constant 8 : index
    %c0_30 = arith.constant 0 : index
    %73 = vector.load %arg7[%c8_29, %c0_30] : memref<36x256xf32, #tpu.memory_space<vmem>>, vector<4x256xf32>
    tpu.vector_store %arg7[%c8_29, %c0_30], %72 {strides = array<i32>} : memref<36x256xf32, #tpu.memory_space<vmem>>, vector<4x256xf32>,
    %c1_i32_31 = arith.constant 1 : i32
    %74 = tpu.dynamic_rotate %58 by %c1_i32_31 dim 1 : vector<4x256xf32>, i32 -> vector<4x256xf32>
    %75 = vector.extract_strided_slice %3 {offsets = [3, 0], sizes = [1, 256], strides = [1, 1]} : vector<9x256xf32> to vector<1x256xf32>
    %76 = vector.broadcast %75 : vector<1x256xf32> to vector<4x256xf32>
    %77 = arith.mulf %74, %76 : vector<4x256xf32>
    %c12_32 = arith.constant 12 : index
    %c0_33 = arith.constant 0 : index
    %78 = vector.load %arg7[%c12_32, %c0_33] : memref<36x256xf32, #tpu.memory_space<vmem>>, vector<4x256xf32>
    tpu.vector_store %arg7[%c12_32, %c0_33], %77 {strides = array<i32>} : memref<36x256xf32, #tpu.memory_space<vmem>>, vector<4x256xf32>,
    %c16_34 = arith.constant 16 : index
    %c0_35 = arith.constant 0 : index
    %79 = vector.load %arg7[%c16_34, %c0_35] : memref<36x256xf32, #tpu.memory_space<vmem>>, vector<4x256xf32>
    tpu.vector_store %arg7[%c16_34, %c0_35], %58 {strides = array<i32>} : memref<36x256xf32, #tpu.memory_space<vmem>>, vector<4x256xf32>,
    %c255_i32_36 = arith.constant 255 : i32
    %80 = tpu.dynamic_rotate %58 by %c255_i32_36 dim 1 : vector<4x256xf32>, i32 -> vector<4x256xf32>
    %81 = vector.extract_strided_slice %3 {offsets = [5, 0], sizes = [1, 256], strides = [1, 1]} : vector<9x256xf32> to vector<1x256xf32>
    %82 = vector.broadcast %81 : vector<1x256xf32> to vector<4x256xf32>
    %83 = arith.mulf %80, %82 : vector<4x256xf32>
    %c20_37 = arith.constant 20 : index
    %c0_38 = arith.constant 0 : index
    %84 = vector.load %arg7[%c20_37, %c0_38] : memref<36x256xf32, #tpu.memory_space<vmem>>, vector<4x256xf32>
    tpu.vector_store %arg7[%c20_37, %c0_38], %83 {strides = array<i32>} : memref<36x256xf32, #tpu.memory_space<vmem>>, vector<4x256xf32>,
    %c241_i32_39 = arith.constant 241 : i32
    %85 = tpu.dynamic_rotate %58 by %c241_i32_39 dim 1 : vector<4x256xf32>, i32 -> vector<4x256xf32>
    %86 = vector.extract_strided_slice %3 {offsets = [6, 0], sizes = [1, 256], strides = [1, 1]} : vector<9x256xf32> to vector<1x256xf32>
    %87 = vector.broadcast %86 : vector<1x256xf32> to vector<4x256xf32>
    %88 = arith.mulf %85, %87 : vector<4x256xf32>
    %c24_40 = arith.constant 24 : index
    %c0_41 = arith.constant 0 : index
    %89 = vector.load %arg7[%c24_40, %c0_41] : memref<36x256xf32, #tpu.memory_space<vmem>>, vector<4x256xf32>
    tpu.vector_store %arg7[%c24_40, %c0_41], %88 {strides = array<i32>} : memref<36x256xf32, #tpu.memory_space<vmem>>, vector<4x256xf32>,
    %c240_i32_42 = arith.constant 240 : i32
    %90 = tpu.dynamic_rotate %58 by %c240_i32_42 dim 1 : vector<4x256xf32>, i32 -> vector<4x256xf32>
    %91 = vector.extract_strided_slice %3 {offsets = [7, 0], sizes = [1, 256], strides = [1, 1]} : vector<9x256xf32> to vector<1x256xf32>
    %92 = vector.broadcast %91 : vector<1x256xf32> to vector<4x256xf32>
    %93 = arith.mulf %90, %92 : vector<4x256xf32>
    %c28_43 = arith.constant 28 : index
    %c0_44 = arith.constant 0 : index
    %94 = vector.load %arg7[%c28_43, %c0_44] : memref<36x256xf32, #tpu.memory_space<vmem>>, vector<4x256xf32>
    tpu.vector_store %arg7[%c28_43, %c0_44], %93 {strides = array<i32>} : memref<36x256xf32, #tpu.memory_space<vmem>>, vector<4x256xf32>,
    %c239_i32_45 = arith.constant 239 : i32
    %95 = tpu.dynamic_rotate %58 by %c239_i32_45 dim 1 : vector<4x256xf32>, i32 -> vector<4x256xf32>
    %96 = vector.extract_strided_slice %3 {offsets = [8, 0], sizes = [1, 256], strides = [1, 1]} : vector<9x256xf32> to vector<1x256xf32>
    %97 = vector.broadcast %96 : vector<1x256xf32> to vector<4x256xf32>
    %98 = arith.mulf %95, %97 : vector<4x256xf32>
    %c32_46 = arith.constant 32 : index
    %c0_47 = arith.constant 0 : index
    %99 = vector.load %arg7[%c32_46, %c0_47] : memref<36x256xf32, #tpu.memory_space<vmem>>, vector<4x256xf32>
    tpu.vector_store %arg7[%c32_46, %c0_47], %98 {strides = array<i32>} : memref<36x256xf32, #tpu.memory_space<vmem>>, vector<4x256xf32>,
    %c0_48 = arith.constant 0 : index
    %c0_49 = arith.constant 0 : index
    %100 = vector.load %arg7[%c0_48, %c0_49] : memref<36x256xf32, #tpu.memory_space<vmem>>, vector<36x256xf32>
    %101 = arith.truncf %100 : vector<36x256xf32> to vector<36x256xbf16>
    %c0_50 = arith.constant 0 : index
    %c0_51 = arith.constant 0 : index
    %102 = vector.load %arg3[%c0_50, %c0_51] : memref<4x36xbf16, #tpu.memory_space<vmem>>, vector<4x36xbf16>
    %cst_52 = arith.constant dense<0.000000e+00> : vector<4x256xf32>
    %103 = tpu.matmul %102, %101, %cst_52 {dimension_numbers = #tpu.dot_dimension_numbers<[1], [0], [0], [1], [0, 0, 1, 1], [], []>} : vector<4x36xbf16>, vector<36x256xbf16>, vector<4x256xf32> -> vector<4x256xf32>
    %104 = vector.extract_strided_slice %2 {offsets = [2, 0, 0], sizes = [1, 4, 1], strides = [1, 1, 1]} : vector<4x4x1xf32> to vector<1x4x1xf32>
    %105 = vector.shape_cast %104 : vector<1x4x1xf32> to vector<4x1xf32>
    %106 = vector.broadcast %105 : vector<4x1xf32> to vector<4x256xf32>
    %107 = arith.mulf %103, %106 : vector<4x256xf32>
    %108 = vector.extract_strided_slice %2 {offsets = [3, 0, 0], sizes = [1, 4, 1], strides = [1, 1, 1]} : vector<4x4x1xf32> to vector<1x4x1xf32>
    %109 = vector.shape_cast %108 : vector<1x4x1xf32> to vector<4x1xf32>
    %110 = vector.broadcast %109 : vector<4x1xf32> to vector<4x256xf32>
    %111 = arith.addf %107, %110 : vector<4x256xf32>
    %112 = arith.addf %111, %1 : vector<4x256xf32>
    %cst_53 = arith.constant 0.000000e+00 : f32
    %113 = vector.broadcast %cst_53 : f32 to vector<4x256xf32>
    %114 = arith.maximumf %112, %113 : vector<4x256xf32>
    %c0_54 = arith.constant 0 : index
    %c0_55 = arith.constant 0 : index
    %c0_56 = arith.constant 0 : index
    %115 = vector.load %arg6[%c0_54, %c0_55, %c0_56] : memref<1x4x256xf32, #tpu.memory_space<vmem>>, vector<1x4x256xf32>
    %116 = vector.shape_cast %115 : vector<1x4x256xf32> to vector<4x256xf32>
    %117 = vector.shape_cast %114 : vector<4x256xf32> to vector<1x4x256xf32>
    tpu.vector_store %arg6[%c0_54, %c0_55, %c0_56], %117 {strides = array<i32>} : memref<1x4x256xf32, #tpu.memory_space<vmem>>, vector<1x4x256xf32>,
    return
  }
  func.func @transform_0(%arg0: i32) -> (i32, i32, i32) {
    %c0_i32 = arith.constant 0 : i32
    %c0_i32_0 = arith.constant 0 : i32
    %c0_i32_1 = arith.constant 0 : i32
    return %arg0, %c0_i32, %c0_i32_0 : i32, i32, i32
  }
  func.func @transform_1(%arg0: i32) -> (i32, i32) {
    %c0_i32 = arith.constant 0 : i32
    %c0_i32_0 = arith.constant 0 : i32
    %c0_i32_1 = arith.constant 0 : i32
    return %c0_i32, %c0_i32_0 : i32, i32
  }
  func.func @transform_2(%arg0: i32) -> (i32, i32) {
    %c0_i32 = arith.constant 0 : i32
    %c0_i32_0 = arith.constant 0 : i32
    %c0_i32_1 = arith.constant 0 : i32
    return %c0_i32, %c0_i32_0 : i32, i32
  }
  func.func @transform_3(%arg0: i32) -> (i32, i32, i32) {
    %c0_i32 = arith.constant 0 : i32
    %c0_i32_0 = arith.constant 0 : i32
    %c0_i32_1 = arith.constant 0 : i32
    %c0_i32_2 = arith.constant 0 : i32
    return %c0_i32, %c0_i32_0, %c0_i32_1 : i32, i32, i32
  }
  func.func @transform_4(%arg0: i32) -> (i32, i32) {
    %c0_i32 = arith.constant 0 : i32
    %c0_i32_0 = arith.constant 0 : i32
    %c0_i32_1 = arith.constant 0 : i32
    return %c0_i32, %c0_i32_0 : i32, i32
  }
  func.func @transform_5(%arg0: i32) -> (i32, i32, i32) {
    %c0_i32 = arith.constant 0 : i32
    %c0_i32_0 = arith.constant 0 : i32
    %c0_i32_1 = arith.constant 0 : i32
    return %arg0, %c0_i32, %c0_i32_0 : i32, i32, i32
  }
}

</mosaic_0001>

<llo_original>
// kernel: residual_block_nchw.1
$region0: #{residual_block_nchw.1}
  #allocation0 [shape = 'u32[]', space=smem, size = 0x4, offset = 0x4, fixed_abs, tag = 'smem constant byte address 0x4 - core index']
  #allocation1 [shape = 'u32[144,128]{1,0:T(1,128)}', space=vmem, size = 0x12000, scoped, tag = 'internal scratch']
  #allocation2 [shape = 'f32[36,256]{1,0:T(8,128)}', space=vmem, size = 0xa000, scoped, tag = 'scratch operand']
  %s0 = inlined_call_operand.vmem [shape: f32[2,4,256], index: 0, kind: input, shape index: {}]
  %s1 = inlined_call_operand.vmem [shape: bf16[4,36], index: 1, kind: input, shape index: {}]
  %s2 = inlined_call_operand.vmem [shape: bf16[4,36], index: 2, kind: input, shape index: {}]
  %s3 = inlined_call_operand.vmem [shape: f32[4,4,1], index: 3, kind: input, shape index: {}]
  %s4 = inlined_call_operand.vmem [shape: f32[9,256], index: 4, kind: input, shape index: {}]
  %s5 = inlined_call_operand.vmem [shape: f32[2,4,256], index: 5, kind: output, shape index: {}]
  %s6 = sld [smem:[#allocation0]]
  $region53: #{residual_block_nchw.1} parent=0
    _
  %s8 = ssub.s32 1, %s6
  %s9 = scalar_select 0, %s8, %s6
  loop: start=0, step=1, limit=4
  $region2: #{residual_block_nchw.1} parent=0 // loop_pre_header
    _
  $region3: #{residual_block_nchw.1} parent=0 // loop_header
    %s11 = sphi 0, %s15
    %p12 = scmp.ge.s32.totalorder %s11, 4
    %s21 = sphi 0, %s23
    %s24 = sphi 0, %s21
    %s25 = sphi 0, %s24
    %s41 = sphi 0, %s25
    %s45 = sphi 0, %s45
    %s47 = sphi 0, %s45
    %s48 = sphi 0, %s47
    %s62 = sphi 0, %s48
    %s66 = sphi 0, %s66
    %s68 = sphi 0, %s66
    %s69 = sphi 0, %s68
    %s83 = sphi 0, %s69
    %s87 = sphi 0, %s87
    %s89 = sphi 0, %s87
    %s90 = sphi 0, %s89
    %s104 = sphi 0, %s90
    %s108 = sphi 0, %s108
    %s110 = sphi 0, %s108
    %s111 = sphi 0, %s110
    %s125 = sphi 0, %s111
    %s131 = sphi 0, %s133
    %s134 = sphi 0, %s131
    %s135 = sphi 0, %s134
    %s151 = sphi 0, %s135
  $region4: #{residual_block_nchw.1} parent=0 // loop_header_branch
    %14 = sbr.rel (%p12) target = $region8
  $region5: #{residual_block_nchw.1} parent=0 // loop_body
    %s16 = ssub.s32 %s11, 1
    %s17 = ssub.s32 %s11, 2
    %s18 = sadd.s32 %s11, 1
    %s19 = ssub.s32 %s11, %s18
    %p20 = scmp.eq.s32.totalorder %s19, 0
    %s22 = sadd.s32 %s21, 1
    %s23 = scalar_select %p20, %s21, %s22
    %p26 = pneg %p20
    %p27 = scmp.eq.s32.totalorder %s11, 1
    %p28 = por %p26, %p27
    %p29 = scmp.ne.s32.totalorder %s21, %s24
    %p30 = scmp.eq.s32.totalorder %s11, 0
    %p31 = por %p29, %p30
    %p32 = scmp.ne.s32.totalorder %s21, %s24
    %p33 = scmp.eq.s32.totalorder %s16, 1
    %p34 = por %p32, %p33
    %p35 = scmp.ne.s32.totalorder %s24, %s25
    %p36 = scmp.eq.s32.totalorder %s16, 0
    %p37 = por %p35, %p36
    %p38 = scmp.ne.s32.totalorder %s24, %s25
    %p39 = scmp.eq.s32.totalorder %s17, 1
    %p40 = por %p38, %p39
    %p42 = scmp.ne.s32.totalorder %s25, %s41
    %p43 = scmp.eq.s32.totalorder %s17, 0
    %p44 = por %p42, %p43
    %s46 = sadd.s32 %s45, 1
    %p49 = scmp.eq.s32.totalorder %s11, 1
    %p50 = scmp.ne.s32.totalorder %s45, %s47
    %p51 = scmp.eq.s32.totalorder %s11, 0
    %p52 = por %p50, %p51
    %p53 = scmp.ne.s32.totalorder %s45, %s47
    %p54 = scmp.eq.s32.totalorder %s16, 1
    %p55 = por %p53, %p54
    %p56 = scmp.ne.s32.totalorder %s47, %s48
    %p57 = scmp.eq.s32.totalorder %s16, 0
    %p58 = por %p56, %p57
    %p59 = scmp.ne.s32.totalorder %s47, %s48
    %p60 = scmp.eq.s32.totalorder %s17, 1
    %p61 = por %p59, %p60
    %p63 = scmp.ne.s32.totalorder %s48, %s62
    %p64 = scmp.eq.s32.totalorder %s17, 0
    %p65 = por %p63, %p64
    %s67 = sadd.s32 %s66, 1
    %p70 = scmp.eq.s32.totalorder %s11, 1
    %p71 = scmp.ne.s32.totalorder %s66, %s68
    %p72 = scmp.eq.s32.totalorder %s11, 0
    %p73 = por %p71, %p72
    %p74 = scmp.ne.s32.totalorder %s66, %s68
    %p75 = scmp.eq.s32.totalorder %s16, 1
    %p76 = por %p74, %p75
    %p77 = scmp.ne.s32.totalorder %s68, %s69
    %p78 = scmp.eq.s32.totalorder %s16, 0
    %p79 = por %p77, %p78
    %p80 = scmp.ne.s32.totalorder %s68, %s69
    %p81 = scmp.eq.s32.totalorder %s17, 1
    %p82 = por %p80, %p81
    %p84 = scmp.ne.s32.totalorder %s69, %s83
    %p85 = scmp.eq.s32.totalorder %s17, 0
    %p86 = por %p84, %p85
    %s88 = sadd.s32 %s87, 1
    %p91 = scmp.eq.s32.totalorder %s11, 1
    %p92 = scmp.ne.s32.totalorder %s87, %s89
    %p93 = scmp.eq.s32.totalorder %s11, 0
    %p94 = por %p92, %p93
    %p95 = scmp.ne.s32.totalorder %s87, %s89
    %p96 = scmp.eq.s32.totalorder %s16, 1
    %p97 = por %p95, %p96
    %p98 = scmp.ne.s32.totalorder %s89, %s90
    %p99 = scmp.eq.s32.totalorder %s16, 0
    %p100 = por %p98, %p99
    %p101 = scmp.ne.s32.totalorder %s89, %s90
    %p102 = scmp.eq.s32.totalorder %s17, 1
    %p103 = por %p101, %p102
    %p105 = scmp.ne.s32.totalorder %s90, %s104
    %p106 = scmp.eq.s32.totalorder %s17, 0
    %p107 = por %p105, %p106
    %s109 = sadd.s32 %s108, 1
    %p112 = scmp.eq.s32.totalorder %s11, 1
    %p113 = scmp.ne.s32.totalorder %s108, %s110
    %p114 = scmp.eq.s32.totalorder %s11, 0
    %p115 = por %p113, %p114
    %p116 = scmp.ne.s32.totalorder %s108, %s110
    %p117 = scmp.eq.s32.totalorder %s16, 1
    %p118 = por %p116, %p117
    %p119 = scmp.ne.s32.totalorder %s110, %s111
    %p120 = scmp.eq.s32.totalorder %s16, 0
    %p121 = por %p119, %p120
    %p122 = scmp.ne.s32.totalorder %s110, %s111
    %p123 = scmp.eq.s32.totalorder %s17, 1
    %p124 = por %p122, %p123
    %p126 = scmp.ne.s32.totalorder %s111, %s125
    %p127 = scmp.eq.s32.totalorder %s17, 0
    %p128 = por %p126, %p127
    %s129 = ssub.s32 %s11, %s18
    %p130 = scmp.eq.s32.totalorder %s129, 0
    %s132 = sadd.s32 %s131, 1
    %s133 = scalar_select %p130, %s131, %s132
    %p136 = pneg %p130
    %p137 = scmp.eq.s32.totalorder %s11, 1
    %p138 = por %p136, %p137
    %p139 = scmp.ne.s32.totalorder %s131, %s134
    %p140 = scmp.eq.s32.totalorder %s11, 0
    %p141 = por %p139, %p140
    %p142 = scmp.ne.s32.totalorder %s131, %s134
    %p143 = scmp.eq.s32.totalorder %s16, 1
    %p144 = por %p142, %p143
    %p145 = scmp.ne.s32.totalorder %s134, %s135
    %p146 = scmp.eq.s32.totalorder %s16, 0
    %p147 = por %p145, %p146
    %p148 = scmp.ne.s32.totalorder %s134, %s135
    %p149 = scmp.eq.s32.totalorder %s17, 1
    %p150 = por %p148, %p149
    %p152 = scmp.ne.s32.totalorder %s135, %s151
    %p153 = scmp.eq.s32.totalorder %s17, 0
    %p154 = por %p152, %p153
    %p155 = scmp.le.s32.totalorder 1, %s11
    %p156 = scmp.lt.s32.totalorder %s11, 3
    %p157 = pnand %p155, %p156
    %p158 = pneg %p157
    // Predicated region
    $region9: #{residual_block_nchw.1} parent=5 // pred_check
      _
    $region10: #{residual_block_nchw.1} parent=5 // pred_check_branch
      %160 = sbr.rel (%p157) target = $region12
    $region11: #{residual_block_nchw.1} parent=5 // pred_region
      %s161 = ssub.s32 %s11, 1
      // Predicated region
      $region13: #{residual_block_nchw.1} parent=11 // pred_check
        %p162 = pneg %p58
      $region14: #{residual_block_nchw.1} parent=11 // pred_check_branch
        %164 = sbr.rel (%p162) target = $region16
      $region15: #{residual_block_nchw.1} parent=11 // pred_region
        _
      $region16: #{residual_block_nchw.1} parent=11 // pred_fallthru
        _
      // Predicated region
      $region17: #{residual_block_nchw.1} parent=11 // pred_check
        %p165 = pneg %p79
      $region18: #{residual_block_nchw.1} parent=11 // pred_check_branch
        %167 = sbr.rel (%p165) target = $region20
      $region19: #{residual_block_nchw.1} parent=11 // pred_region
        _
      $region20: #{residual_block_nchw.1} parent=11 // pred_fallthru
        _
      // Predicated region
      $region21: #{residual_block_nchw.1} parent=11 // pred_check
        %p168 = pneg %p100
      $region22: #{residual_block_nchw.1} parent=11 // pred_check_branch
        %170 = sbr.rel (%p168) target = $region24
      $region23: #{residual_block_nchw.1} parent=11 // pred_region
        _
      $region24: #{residual_block_nchw.1} parent=11 // pred_fallthru
        _
      // Predicated region
      $region25: #{residual_block_nchw.1} parent=11 // pred_check
        %p171 = pneg %p121
      $region26: #{residual_block_nchw.1} parent=11 // pred_check_branch
        %173 = sbr.rel (%p171) target = $region28
      $region27: #{residual_block_nchw.1} parent=11 // pred_region
        _
      $region28: #{residual_block_nchw.1} parent=11 // pred_fallthru
        _
    $region12: #{residual_block_nchw.1} parent=5 // pred_fallthru
      _
    %p174 = scmp.lt.s32.totalorder %s11, 2
    // Predicated region
    $region29: #{residual_block_nchw.1} parent=5 // pred_check
      %p175 = pneg %p174
    $region30: #{residual_block_nchw.1} parent=5 // pred_check_branch
      %177 = sbr.rel (%p175) target = $region32
    $region31: #{residual_block_nchw.1} parent=5 // pred_region
      // Predicated region
      $region33: #{residual_block_nchw.1} parent=31 // pred_check
        %p178 = pneg %p31
      $region34: #{residual_block_nchw.1} parent=31 // pred_check_branch
        %180 = sbr.rel (%p178) target = $region36
      $region35: #{residual_block_nchw.1} parent=31 // pred_region
        %p181 = scmp.lt.s32.totalorder %s11, 1
        %s182 = scalar_select %p181, %s11, 1
        %s183 = smul.addr %s182, 2
        %s184 = smul.addr %s183, 4
        %s185 = scalar_lea.vmem %s0, %s184
      $region36: #{residual_block_nchw.1} parent=31 // pred_fallthru
        _
    $region32: #{residual_block_nchw.1} parent=5 // pred_fallthru
      _
    %p186 = scmp.le.s32.totalorder 1, %s11
    %p187 = scmp.lt.s32.totalorder %s11, 3
    %p188 = pnand %p186, %p187
    %p189 = pneg %p188
    // Predicated region
    $region37: #{residual_block_nchw.1} parent=5 // pred_check
      _
    $region38: #{residual_block_nchw.1} parent=5 // pred_check_branch
      %191 = sbr.rel (%p188) target = $region40
    $region39: #{residual_block_nchw.1} parent=5 // pred_region
      %s192 = ssub.s32 %s11, 1
      %p193 = scmp.lt.s32.totalorder %s16, 1
      %s194 = scalar_select %p193, %s16, 1
      %s195 = smul.addr %s194, 2
      %s196 = smul.addr %s195, 4
      %s197 = scalar_lea.vmem %s0, %s196
      %p198 = pneg %p37
      %p199 = pneg %p34
      %p200 = pneg %p58
      %p201 = pneg %p55
      %p202 = pneg %p79
      %p203 = pneg %p76
      %p204 = pneg %p100
      %p205 = pneg %p97
      %p206 = pneg %p121
      %p207 = pneg %p118
      %p208 = pneg %p147
      %p209 = pneg %p144
      %p210 = scmp.lt.s32.totalorder %s16, 1
      %s211 = scalar_select %p210, %s16, 1
      %s212 = smul.addr %s211, 2
      %s213 = smul.addr %s212, 4
      %s214 = scalar_lea.vmem %s5, %s213
      %p215 = scmp.lt.s32.totalorder %s16, 1
      %s216 = scalar_select %p215, %s16, 1
      %s217 = smul.addr %s216, 2
      %s218 = smul.addr %s217, 4
      %s219 = scalar_lea.vmem %s0, %s218
      %p220 = scmp.lt.s32.totalorder %s16, 1
      %s221 = scalar_select %p220, %s16, 1
      %s222 = smul.addr %s221, 2
      %s223 = smul.addr %s222, 4
      %s224 = scalar_lea.vmem %s5, %s223
      %v226 = vld [vmem:[%s219] sm:$0xff]
      %v227 = vld [vmem:[%s3] sm:$0xf]
      %v228 = vld [vmem:[%s3 + $0x4] sm:$0xf]
      %v229 = vld [vmem:[%s3 + $0x8] sm:$0xf]
      %v230 = vld [vmem:[%s3 + $0xc] sm:$0xf]
      %v231 = vld [vmem:[%s4] sm:$0xff]
      %v232 = vld [vmem:[%s4 + $0x8] sm:$0xff]
      %v233 = vld [vmem:[%s4 + $0x10] sm:$0x1]
      %v234 = vld [vmem:[%s4 + $0x18] sm:$0x1]
      %v236 = vcombine.high %v226, %v226
      %238 = vrot.lane.b32.xlu0 %v226, 17
      %v239 = vpop.permute.xlu0 %238
      %240 = vrot.lane.b32.xlu0 %v236, 17
      %v241 = vpop.permute.xlu0 %240
      %v242 = vlaneseq
      %v243 = vand.u32 %v242, 127
      %vm244 = vcmp.lt.s32.totalorder %v243, 17
      %v245 = vsel %vm244, %v239, %v241
      %v246 = vsel %vm244, %v241, %v239
      %v247 = vlaneseq
      %v248 = vshrl.u32 %v247, 7
      %v249 = vsub.s32 0, %v248
      %v250 = vrot.slane %v231, %v249
      %v251 = vlaneseq
      %v252 = vshrl.u32 %v251, 7
      %v253 = vsub.s32 0, %v252
      %v254 = vrot.slane %v232, %v253
      %v255 = vmul.f32 %v246, %v250
      %v256 = vmul.f32 %v245, %v254
      %257 = vst [vmem:[#allocation2] sm:$0xf] %v255
      %258 = vst [vmem:[#allocation2 + $0x8] sm:$0xf] %v256
      %259 = vrot.lane.b32.xlu0 %v226, 16
      %v260 = vpop.permute.xlu0 %259
      %261 = vrot.lane.b32.xlu0 %v236, 16
      %v262 = vpop.permute.xlu0 %261
      %vm263 = vcmp.lt.s32.totalorder %v243, 16
      %v264 = vsel %vm263, %v260, %v262
      %v265 = vsel %vm263, %v262, %v260
      %v266 = vlaneseq
      %v267 = vshrl.u32 %v266, 7
      %v268 = vsub.s32 1, %v267
      %v269 = vrot.slane %v231, %v268
      %v270 = vlaneseq
      %v271 = vshrl.u32 %v270, 7
      %v272 = vsub.s32 1, %v271
      %v273 = vrot.slane %v232, %v272
      %v274 = vmul.f32 %v265, %v269
      %v275 = vmul.f32 %v264, %v273
      %v278 = vrot.slane %v274, 4
      %v279 = vrot.slane %v275, 4
      %282 = vst [vmem:[#allocation2] sm:$0xf0] %v278
      %283 = vst [vmem:[#allocation2 + $0x8] sm:$0xf0] %v279
      %284 = vrot.lane.b32.xlu0 %v226, 15
      %v285 = vpop.permute.xlu0 %284
      %286 = vrot.lane.b32.xlu0 %v236, 15
      %v287 = vpop.permute.xlu0 %286
      %vm288 = vcmp.lt.s32.totalorder %v243, 15
      %v289 = vsel %vm288, %v285, %v287
      %v290 = vsel %vm288, %v287, %v285
      %v291 = vlaneseq
      %v292 = vshrl.u32 %v291, 7
      %v293 = vsub.s32 2, %v292
      %v294 = vrot.slane %v231, %v293
      %v295 = vlaneseq
      %v296 = vshrl.u32 %v295, 7
      %v297 = vsub.s32 2, %v296
      %v298 = vrot.slane %v232, %v297
      %v299 = vmul.f32 %v290, %v294
      %v300 = vmul.f32 %v289, %v298
      %301 = vst [vmem:[#allocation2 + $0x10] sm:$0xf] %v299
      %302 = vst [vmem:[#allocation2 + $0x18] sm:$0xf] %v300
      %303 = vrot.lane.b32.xlu0 %v226, 1
      %v304 = vpop.permute.xlu0 %303
      %305 = vrot.lane.b32.xlu0 %v236, 1
      %v306 = vpop.permute.xlu0 %305
      %vm307 = vcmp.lt.s32.totalorder %v243, 1
      %v308 = vsel %vm307, %v304, %v306
      %v309 = vsel %vm307, %v306, %v304
      %v310 = vlaneseq
      %v311 = vshrl.u32 %v310, 7
      %v312 = vsub.s32 3, %v311
      %v313 = vrot.slane %v231, %v312
      %v314 = vlaneseq
      %v315 = vshrl.u32 %v314, 7
      %v316 = vsub.s32 3, %v315
      %v317 = vrot.slane %v232, %v316
      %v318 = vmul.f32 %v309, %v313
      %v319 = vmul.f32 %v308, %v317
      %v322 = vrot.slane %v318, 4
      %v323 = vrot.slane %v319, 4
      %326 = vst [vmem:[#allocation2 + $0x10] sm:$0xf0] %v322
      %327 = vst [vmem:[#allocation2 + $0x18] sm:$0xf0] %v323
      %328 = vst [vmem:[#allocation2 + $0x20] sm:$0xf] %v226
      %329 = vst [vmem:[#allocation2 + $0x28] sm:$0xf] %v236
      %330 = vrot.lane.b32.xlu0 %v226, 127
      %v331 = vpop.permute.xlu0 %330
      %332 = vrot.lane.b32.xlu0 %v236, 127
      %v333 = vpop.permute.xlu0 %332
      %vm334 = vcmp.lt.s32.totalorder %v243, 127
      %v335 = vsel %vm334, %v331, %v333
      %v336 = vsel %vm334, %v333, %v331
      %v337 = vlaneseq
      %v338 = vshrl.u32 %v337, 7
      %v339 = vsub.s32 5, %v338
      %v340 = vrot.slane %v231, %v339
      %v341 = vlaneseq
      %v342 = vshrl.u32 %v341, 7
      %v343 = vsub.s32 5, %v342
      %v344 = vrot.slane %v232, %v343
      %v345 = vmul.f32 %v335, %v340
      %v346 = vmul.f32 %v336, %v344
      %v349 = vrot.slane %v345, 4
      %v350 = vrot.slane %v346, 4
      %353 = vst [vmem:[#allocation2 + $0x20] sm:$0xf0] %v349
      %354 = vst [vmem:[#allocation2 + $0x28] sm:$0xf0] %v350
      %355 = vrot.lane.b32.xlu0 %v226, 113
      %v356 = vpop.permute.xlu0 %355
      %357 = vrot.lane.b32.xlu0 %v236, 113
      %v358 = vpop.permute.xlu0 %357
      %vm359 = vcmp.lt.s32.totalorder %v243, 113
      %v360 = vsel %vm359, %v356, %v358
      %v361 = vsel %vm359, %v358, %v356
      %v362 = vlaneseq
      %v363 = vshrl.u32 %v362, 7
      %v364 = vsub.s32 6, %v363
      %v365 = vrot.slane %v231, %v364
      %v366 = vlaneseq
      %v367 = vshrl.u32 %v366, 7
      %v368 = vsub.s32 6, %v367
      %v369 = vrot.slane %v232, %v368
      %v370 = vmul.f32 %v360, %v365
      %v371 = vmul.f32 %v361, %v369
      %372 = vst [vmem:[#allocation2 + $0x30] sm:$0xf] %v370
      %373 = vst [vmem:[#allocation2 + $0x38] sm:$0xf] %v371
      %374 = vrot.lane.b32.xlu0 %v226, 112
      %v375 = vpop.permute.xlu0 %374
      %376 = vrot.lane.b32.xlu0 %v236, 112
      %v377 = vpop.permute.xlu0 %376
      %vm378 = vcmp.lt.s32.totalorder %v243, 112
      %v379 = vsel %vm378, %v375, %v377
      %v380 = vsel %vm378, %v377, %v375
      %v381 = vlaneseq
      %v382 = vshrl.u32 %v381, 7
      %v383 = vsub.s32 7, %v382
      %v384 = vrot.slane %v231, %v383
      %v385 = vlaneseq
      %v386 = vshrl.u32 %v385, 7
      %v387 = vsub.s32 7, %v386
      %v388 = vrot.slane %v232, %v387
      %v389 = vmul.f32 %v379, %v384
      %v390 = vmul.f32 %v380, %v388
      %v393 = vrot.slane %v389, 4
      %v394 = vrot.slane %v390, 4
      %397 = vst [vmem:[#allocation2 + $0x30] sm:$0xf0] %v393
      %398 = vst [vmem:[#allocation2 + $0x38] sm:$0xf0] %v394
      %399 = vrot.lane.b32.xlu0 %v226, 111
      %v400 = vpop.permute.xlu0 %399
      %401 = vrot.lane.b32.xlu0 %v236, 111
      %v402 = vpop.permute.xlu0 %401
      %vm403 = vcmp.lt.s32.totalorder %v243, 111
      %v404 = vsel %vm403, %v400, %v402
      %v405 = vsel %vm403, %v402, %v400
      %v406 = vlaneseq
      %v407 = vshrl.u32 %v406, 7
      %v408 = vsub.s32 0, %v407
      %v409 = vrot.slane %v233, %v408
      %v410 = vlaneseq
      %v411 = vshrl.u32 %v410, 7
      %v412 = vsub.s32 0, %v411
      %v413 = vrot.slane %v234, %v412
      %v414 = vmul.f32 %v404, %v409
      %v415 = vmul.f32 %v405, %v413
      %416 = vst [vmem:[#allocation2 + $0x40] sm:$0xf] %v414
      %417 = vst [vmem:[#allocation2 + $0x48] sm:$0xf] %v415
      %v418 = vld [vmem:[#allocation2] sm:$0xff]
      %v419 = vld [vmem:[#allocation2 + $0x8] sm:$0xff]
      %v420 = vld [vmem:[#allocation2 + $0x10] sm:$0xff]
      %v421 = vld [vmem:[#allocation2 + $0x18] sm:$0xff]
      %v422 = vld [vmem:[#allocation2 + $0x20] sm:$0xff]
      %v423 = vld [vmem:[#allocation2 + $0x28] sm:$0xff]
      %v424 = vld [vmem:[#allocation2 + $0x30] sm:$0xff]
      %v425 = vld [vmem:[#allocation2 + $0x38] sm:$0xff]
      %v426 = vld [vmem:[#allocation2 + $0x40] sm:$0xf]
      %v427 = vld [vmem:[#allocation2 + $0x48] sm:$0xf]
      %v428 = vpack.c.bf16 %v420, %v418
      %v429 = vpack.c.bf16 %v421, %v419
      %v430 = vpack.c.bf16 %v424, %v422
      %v431 = vpack.c.bf16 %v425, %v423
      %v432 = vpack.c.bf16 %v426, %v426
      %v433 = vpack.c.bf16 %v427, %v427
      %v434 = vld [vmem:[%s1] sm:$0x3]
      %vm435 = vcmask 293888
      %v437 = vsel %vm435, %v434, 0
      %vm439 = vcmask 1041408
      %v441 = vsel %vm439, %v432, 0
      %v444 = vsel %vm439, %v433, 0
      %446 = vmatprep.subr.bf16.mxu0 0
      %447 = vmatpush1.bf16.msra.mxu0 0
      %448 = vmatprep.subr.bf16.mxu0 0
      %449 = vmatpush1.bf16.msra.mxu0 0
      %450 = vmatprep.subr.bf16.mxu0 0
      %451 = vmatpush1.bf16.msra.mxu0 0
      %452 = vmatprep.subr.bf16.mxu0 0
      %453 = vmatpush1.bf16.msra.mxu0 0
      %454 = vmatprep.subr.bf16.mxu0 0
      %455 = vmatpush1.bf16.msra.mxu0 0
      %456 = vmatprep.subr.bf16.mxu0 %v444
      %457 = vmatpush1.bf16.msra.mxu0 %v441
      %458 = vmatprep.subr.bf16.mxu0 %v431
      %459 = vmatpush1.bf16.msra.mxu0 %v430
      %460 = vmatprep.subr.bf16.mxu0 %v429
      %461 = vmatpush1.bf16.msra.mxu0 %v428
      %462 = vmatprep.subr.bf16.mxu0 0
      %463 = vmatpush2.bf16.msra.mxu0 0
      %464 = vmatprep.subr.bf16.mxu0 0
      %465 = vmatpush2.bf16.msra.mxu0 0
      %466 = vmatprep.subr.bf16.mxu0 0
      %467 = vmatpush2.bf16.msra.mxu0 0
      %468 = vmatprep.subr.bf16.mxu0 0
      %469 = vmatpush2.bf16.msra.mxu0 0
      %470 = vmatprep.subr.bf16.mxu0 0
      %471 = vmatpush2.bf16.msra.mxu0 0
      %472 = vmatprep.subr.bf16.mxu0 0
      %473 = vmatpush2.bf16.msra.mxu0 0
      %474 = vmatprep.subr.bf16.mxu0 0
      %475 = vmatpush2.bf16.msra.mxu0 0
      %476 = vmatprep.subr.bf16.mxu0 0
      %477 = vmatpush2.bf16.msra.mxu0 0
      %478 = vmatprep.mubr.bf16.mxu0 0
      %479 = vmatmul.mubr.bf16.gmra.mxu0 %v437
      %v480 = vpop.f32.mrf.mxu0
      %v481 = vadd.f32 0.0, %v480
      %v482 = vpop.f32.mrf.mxu0
      %v483 = vadd.f32 0.0, %v482
      %v484 = vpop.f32.mrf.mxu0
      %v485 = vpop.f32.mrf.mxu0
      %486 = vdwg.mxu0
      %488 = vset.pattern.permute.xlu0 0
      %489 = vperm.xlu0 %488, %v227
      %v490 = vpop.permute.xlu0 %489
      %v492 = vmul.f32 %v481, %v490
      %v493 = vmul.f32 %v483, %v490
      %495 = vset.pattern.permute.xlu0 0
      %496 = vperm.xlu0 %495, %v228
      %v497 = vpop.permute.xlu0 %496
      %v499 = vadd.f32 %v492, %v497
      %v500 = vadd.f32 %v493, %v497
      %v501 = vmax.f32 %v499, 0.0
      %v502 = vmax.f32 %v500, 0.0
      %503 = vrot.lane.b32.xlu0 %v501, 17
      %v504 = vpop.permute.xlu0 %503
      %505 = vrot.lane.b32.xlu0 %v502, 17
      %v506 = vpop.permute.xlu0 %505
      %v507 = vsel %vm244, %v504, %v506
      %v508 = vsel %vm244, %v506, %v504
      %v509 = vmul.f32 %v508, %v250
      %v510 = vmul.f32 %v507, %v254
      %511 = vst [vmem:[#allocation2] sm:$0xf] %v509
      %512 = vst [vmem:[#allocation2 + $0x8] sm:$0xf] %v510
      %513 = vrot.lane.b32.xlu0 %v501, 16
      %v514 = vpop.permute.xlu0 %513
      %515 = vrot.lane.b32.xlu0 %v502, 16
      %v516 = vpop.permute.xlu0 %515
      %v517 = vsel %vm263, %v514, %v516
      %v518 = vsel %vm263, %v516, %v514
      %v519 = vmul.f32 %v518, %v269
      %v520 = vmul.f32 %v517, %v273
      %v523 = vrot.slane %v519, 4
      %v524 = vrot.slane %v520, 4
      %527 = vst [vmem:[#allocation2] sm:$0xf0] %v523
      %528 = vst [vmem:[#allocation2 + $0x8] sm:$0xf0] %v524
      %529 = vrot.lane.b32.xlu0 %v501, 15
      %v530 = vpop.permute.xlu0 %529
      %531 = vrot.lane.b32.xlu0 %v502, 15
      %v532 = vpop.permute.xlu0 %531
      %v533 = vsel %vm288, %v530, %v532
      %v534 = vsel %vm288, %v532, %v530
      %v535 = vmul.f32 %v534, %v294
      %v536 = vmul.f32 %v533, %v298
      %537 = vst [vmem:[#allocation2 + $0x10] sm:$0xf] %v535
      %538 = vst [vmem:[#allocation2 + $0x18] sm:$0xf] %v536
      %539 = vrot.lane.b32.xlu0 %v501, 1
      %v540 = vpop.permute.xlu0 %539
      %541 = vrot.lane.b32.xlu0 %v502, 1
      %v542 = vpop.permute.xlu0 %541
      %v543 = vsel %vm307, %v540, %v542
      %v544 = vsel %vm307, %v542, %v540
      %v545 = vmul.f32 %v544, %v313
      %v546 = vmul.f32 %v543, %v317
      %v549 = vrot.slane %v545, 4
      %v550 = vrot.slane %v546, 4
      %553 = vst [vmem:[#allocation2 + $0x10] sm:$0xf0] %v549
      %554 = vst [vmem:[#allocation2 + $0x18] sm:$0xf0] %v550
      %555 = vst [vmem:[#allocation2 + $0x20] sm:$0xf] %v501
      %556 = vst [vmem:[#allocation2 + $0x28] sm:$0xf] %v502
      %557 = vrot.lane.b32.xlu0 %v501, 127
      %v558 = vpop.permute.xlu0 %557
      %559 = vrot.lane.b32.xlu0 %v502, 127
      %v560 = vpop.permute.xlu0 %559
      %v561 = vsel %vm334, %v558, %v560
      %v562 = vsel %vm334, %v560, %v558
      %v563 = vmul.f32 %v561, %v340
      %v564 = vmul.f32 %v562, %v344
      %v567 = vrot.slane %v563, 4
      %v568 = vrot.slane %v564, 4
      %571 = vst [vmem:[#allocation2 + $0x20] sm:$0xf0] %v567
      %572 = vst [vmem:[#allocation2 + $0x28] sm:$0xf0] %v568
      %573 = vrot.lane.b32.xlu0 %v501, 113
      %v574 = vpop.permute.xlu0 %573
      %575 = vrot.lane.b32.xlu0 %v502, 113
      %v576 = vpop.permute.xlu0 %575
      %v577 = vsel %vm359, %v574, %v576
      %v578 = vsel %vm359, %v576, %v574
      %v579 = vmul.f32 %v577, %v365
      %v580 = vmul.f32 %v578, %v369
      %581 = vst [vmem:[#allocation2 + $0x30] sm:$0xf] %v579
      %582 = vst [vmem:[#allocation2 + $0x38] sm:$0xf] %v580
      %583 = vrot.lane.b32.xlu0 %v501, 112
      %v584 = vpop.permute.xlu0 %583
      %585 = vrot.lane.b32.xlu0 %v502, 112
      %v586 = vpop.permute.xlu0 %585
      %v587 = vsel %vm378, %v584, %v586
      %v588 = vsel %vm378, %v586, %v584
      %v589 = vmul.f32 %v587, %v384
      %v590 = vmul.f32 %v588, %v388
      %v593 = vrot.slane %v589, 4
      %v594 = vrot.slane %v590, 4
      %597 = vst [vmem:[#allocation2 + $0x30] sm:$0xf0] %v593
      %598 = vst [vmem:[#allocation2 + $0x38] sm:$0xf0] %v594
      %599 = vrot.lane.b32.xlu0 %v501, 111
      %v600 = vpop.permute.xlu0 %599
      %601 = vrot.lane.b32.xlu0 %v502, 111
      %v602 = vpop.permute.xlu0 %601
      %v603 = vsel %vm403, %v600, %v602
      %v604 = vsel %vm403, %v602, %v600
      %v605 = vmul.f32 %v603, %v409
      %v606 = vmul.f32 %v604, %v413
      %607 = vst [vmem:[#allocation2 + $0x40] sm:$0xf] %v605
      %608 = vst [vmem:[#allocation2 + $0x48] sm:$0xf] %v606
      %v609 = vld [vmem:[#allocation2] sm:$0xff]
      %v610 = vld [vmem:[#allocation2 + $0x8] sm:$0xff]
      %v611 = vld [vmem:[#allocation2 + $0x10] sm:$0xff]
      %v612 = vld [vmem:[#allocation2 + $0x18] sm:$0xff]
      %v613 = vld [vmem:[#allocation2 + $0x20] sm:$0xff]
      %v614 = vld [vmem:[#allocation2 + $0x28] sm:$0xff]
      %v615 = vld [vmem:[#allocation2 + $0x30] sm:$0xff]
      %v616 = vld [vmem:[#allocation2 + $0x38] sm:$0xff]
      %v617 = vld [vmem:[#allocation2 + $0x40] sm:$0xf]
      %v618 = vld [vmem:[#allocation2 + $0x48] sm:$0xf]
      %v619 = vpack.c.bf16 %v611, %v609
      %v620 = vpack.c.bf16 %v612, %v610
      %v621 = vpack.c.bf16 %v615, %v613
      %v622 = vpack.c.bf16 %v616, %v614
      %v623 = vpack.c.bf16 %v617, %v617
      %v624 = vpack.c.bf16 %v618, %v618
      %v625 = vld [vmem:[%s2] sm:$0x3]
      %v627 = vsel %vm435, %v625, 0
      %v630 = vsel %vm439, %v623, 0
      %v633 = vsel %vm439, %v624, 0
      %635 = vmatprep.subr.bf16.mxu0 0
      %636 = vmatpush1.bf16.msra.mxu0 0
      %637 = vmatprep.subr.bf16.mxu0 0
      %638 = vmatpush1.bf16.msra.mxu0 0
      %639 = vmatprep.subr.bf16.mxu0 0
      %640 = vmatpush1.bf16.msra.mxu0 0
      %641 = vmatprep.subr.bf16.mxu0 0
      %642 = vmatpush1.bf16.msra.mxu0 0
      %643 = vmatprep.subr.bf16.mxu0 0
      %644 = vmatpush1.bf16.msra.mxu0 0
      %645 = vmatprep.subr.bf16.mxu0 %v633
      %646 = vmatpush1.bf16.msra.mxu0 %v630
      %647 = vmatprep.subr.bf16.mxu0 %v622
      %648 = vmatpush1.bf16.msra.mxu0 %v621
      %649 = vmatprep.subr.bf16.mxu0 %v620
      %650 = vmatpush1.bf16.msra.mxu0 %v619
      %651 = vmatprep.subr.bf16.mxu0 0
      %652 = vmatpush2.bf16.msra.mxu0 0
      %653 = vmatprep.subr.bf16.mxu0 0
      %654 = vmatpush2.bf16.msra.mxu0 0
      %655 = vmatprep.subr.bf16.mxu0 0
      %656 = vmatpush2.bf16.msra.mxu0 0
      %657 = vmatprep.subr.bf16.mxu0 0
      %658 = vmatpush2.bf16.msra.mxu0 0
      %659 = vmatprep.subr.bf16.mxu0 0
      %660 = vmatpush2.bf16.msra.mxu0 0
      %661 = vmatprep.subr.bf16.mxu0 0
      %662 = vmatpush2.bf16.msra.mxu0 0
      %663 = vmatprep.subr.bf16.mxu0 0
      %664 = vmatpush2.bf16.msra.mxu0 0
      %665 = vmatprep.subr.bf16.mxu0 0
      %666 = vmatpush2.bf16.msra.mxu0 0
      %667 = vmatprep.mubr.bf16.mxu0 0
      %668 = vmatmul.mubr.bf16.gmra.mxu0 %v627
      %v669 = vpop.f32.mrf.mxu0
      %v670 = vadd.f32 0.0, %v669
      %v671 = vpop.f32.mrf.mxu0
      %v672 = vadd.f32 0.0, %v671
      %v673 = vpop.f32.mrf.mxu0
      %v674 = vpop.f32.mrf.mxu0
      %675 = vdwg.mxu0
      %677 = vset.pattern.permute.xlu0 0
      %678 = vperm.xlu0 %677, %v229
      %v679 = vpop.permute.xlu0 %678
      %v681 = vmul.f32 %v670, %v679
      %v682 = vmul.f32 %v672, %v679
      %684 = vset.pattern.permute.xlu0 0
      %685 = vperm.xlu0 %684, %v230
      %v686 = vpop.permute.xlu0 %685
      %v688 = vadd.f32 %v681, %v686
      %v689 = vadd.f32 %v682, %v686
      %v690 = vadd.f32 %v688, %v226
      %v691 = vadd.f32 %v689, %v236
      %v692 = vmax.f32 %v690, 0.0
      %v693 = vmax.f32 %v691, 0.0
      %v696 = vcombine.low %v692, %v693
      %698 = vst [vmem:[%s224] sm:$0xff] %v696
      %p699 = scmp.lt.s32.totalorder %s16, 1
      %s700 = scalar_select %p699, %s16, 1
      %s701 = smul.addr %s700, 2
      %s702 = smul.addr %s701, 4
      %s703 = scalar_lea.vmem %s5, %s702
      // Predicated region
      $region41: #{residual_block_nchw.1} parent=39 // pred_check
        %p704 = pneg %p144
      $region42: #{residual_block_nchw.1} parent=39 // pred_check_branch
        %706 = sbr.rel (%p704) target = $region44
      $region43: #{residual_block_nchw.1} parent=39 // pred_region
        _
      $region44: #{residual_block_nchw.1} parent=39 // pred_fallthru
        _
    $region40: #{residual_block_nchw.1} parent=5 // pred_fallthru
      _
    %p707 = scmp.le.s32.totalorder 2, %s11
    // Predicated region
    $region45: #{residual_block_nchw.1} parent=5 // pred_check
      %p708 = pneg %p707
    $region46: #{residual_block_nchw.1} parent=5 // pred_check_branch
      %710 = sbr.rel (%p708) target = $region48
    $region47: #{residual_block_nchw.1} parent=5 // pred_region
      %s711 = ssub.s32 %s11, 2
      // Predicated region
      $region49: #{residual_block_nchw.1} parent=47 // pred_check
        %p712 = pneg %p150
      $region50: #{residual_block_nchw.1} parent=47 // pred_check_branch
        %714 = sbr.rel (%p712) target = $region52
      $region51: #{residual_block_nchw.1} parent=47 // pred_region
        %p715 = scmp.lt.s32.totalorder %s17, 1
        %s716 = scalar_select %p715, %s17, 1
        %s717 = smul.addr %s716, 2
        %s718 = smul.addr %s717, 4
        %s719 = scalar_lea.vmem %s5, %s718
      $region52: #{residual_block_nchw.1} parent=47 // pred_fallthru
        _
    $region48: #{residual_block_nchw.1} parent=5 // pred_fallthru
      _
  $region6: #{residual_block_nchw.1} parent=0 // loop_footer
    %s15 = sadd.s32 1, %s11
  $region7: #{residual_block_nchw.1} parent=0 // loop_footer_branch
    %10 = sbr.rel target = $region3
  $region8: #{residual_block_nchw.1} parent=0 // loop_exit
    _

</llo_original>
